<compile_context>
chip_gen: v6e
topology: v6e:2x2x1
jax: 0.10.0
libtpu: 0.0.40
codegen_flags: <defaults>
</compile_context>

<pallas_src>
import jax
import jax.numpy as jnp
import numpy as np
from jax.experimental import pallas as pl
from jax.experimental.pallas import tpu as pltpu


# ----------------------------- tuning knobs ---------------------------------
_TARGET_TILE_BYTES = 2 * 1024 * 1024   # ~2 MiB per input tile (sweet spot 1-4 MiB)
_HW_MAX_TILE = 512                     # max tile edge along H / W (multiple of 128)
_VMEM_BUDGET = 24 * 1024 * 1024        # in+out, double-buffered; safe on v7x (64 MiB)
_TINY_SLICE_BYTES = 2048               # below this, let XLA handle it


def _shuffle_kernel(x_ref, o_ref):
    # x_ref block: (TL, TH, TW) -> o_ref block: (TL, TW, TH)
    # Batched transpose of the last two dims (XLU work; no MXU involved).
    o_ref[...] = jnp.swapaxes(x_ref[...], -1, -2)


def _largest_divisor_at_most(n, cap):
    cap = min(n, max(1, cap))
    for d in range(cap, 0, -1):
        if n % d == 0:
            return d
    return 1


def _pick_hw_tile(dim, max_tile):
    # Return a tile size for an H/W axis that is either the full dim (legal via
    # the "block equals full array dim" exemption) or a multiple of 128 that
    # divides the dim (legal for lane AND sublane constraints for any dtype).
    if dim <= max_tile or dim % 128 != 0:
        return dim
    t = max_tile - (max_tile % 128)
    while t >= 128:
        if dim % t == 0:
            return t
        t -= 128
    return dim


def shuffle(x):
    """Pallas equivalent of Shuffle.forward(x)."""
    shape = x.shape
    assert x.ndim >= 2, "Shuffle requires at least 2 dims"
    H, W = int(shape[-2]), int(shape[-1])
    itemsize = jnp.dtype(x.dtype).itemsize
    lead = 1
    for d in shape[:-2]:
        lead *= int(d)

    def _xla_fallback():
        # Tiny / awkward shapes: launch + per-step overhead can't beat XLA.
        return jnp.swapaxes(x, -1, -2).reshape(shape)

    if lead == 0 or H * W * itemsize < _TINY_SLICE_BYTES:
        return _xla_fallback()

    # --- tile selection ------------------------------------------------------
    TH = _pick_hw_tile(H, _HW_MAX_TILE)   # input sublane dim / output lane dim
    TW = _pick_hw_tile(W, _HW_MAX_TILE)   # input lane dim / output sublane dim

    # Batch leading slices until the input tile reaches ~_TARGET_TILE_BYTES.
    tl_cap = max(1, _TARGET_TILE_BYTES // (TH * TW * itemsize))
    TL = _largest_divisor_at_most(lead, tl_cap)

    # Double-buffered input + output tiles must fit comfortably in VMEM on all
    # generations (v7x has only 64 MiB). If a huge, non-128-divisible slice
    # forces full-dim tiles past the budget, fall back to XLA.
    if 4 * TL * TH * TW * itemsize > _VMEM_BUDGET:
        return _xla_fallback()

    xf = x.reshape(lead, H, W)

    # TODO(synk): for bf16/int8 on v5e, a bitcast-packed 32-bit store path
    # (pltpu.bitcast) could further widen stores; plain wide tiles used here.
    transposed = pl.pallas_call(
        _shuffle_kernel,
        out_shape=jax.ShapeDtypeStruct((lead, W, H), x.dtype),
        grid=(lead // TL, H // TH, W // TW),
        in_specs=[pl.BlockSpec((TL, TH, TW), lambda i, h, w: (i, h, w))],
        out_specs=pl.BlockSpec((TL, TW, TH), lambda i, h, w: (i, w, h)),
        compiler_params=pltpu.CompilerParams(
            # No reduction axis -> everything parallel (2x on v7x's 2 TCs).
            dimension_semantics=("parallel", "parallel", "parallel"),
            # Plenty of headroom for the ~2 MiB tiles, yet under v7x physical.
            vmem_limit_bytes=48 * 1024 * 1024,
        ),
    )(xf)

    # PyTorch `.view(shape)` on the contiguous transposed buffer.
    return transposed.reshape(shape)


if __name__ == "__main__":
    key = jax.random.PRNGKey(0)
    k1, k2, k3 = jax.random.split(key, 3)

    tests = [
        # Pallas path: TL-batched leading slices, full (H, W) tiles.
        jax.random.normal(k1, (2, 4, 32, 64), dtype=jnp.float32),
        # Pallas path: H tiled into 128-aligned 512-blocks (non-trivial index_map).
        jax.random.normal(k2, (1, 1, 1024, 256), dtype=jnp.float32),
        # Tiny slices: XLA fallback path.
        jax.random.normal(k3, (2, 4, 8, 16), dtype=jnp.float32),
    ]

    for x in tests:
        out = jax.block_until_ready(shuffle(x))
        # Reference: exact semantics of the PyTorch module.
        ref = jnp.swapaxes(x, -1, -2).reshape(x.shape)
        np.testing.assert_allclose(np.asarray(out), np.asarray(ref), rtol=0, atol=0)
        assert out.shape == x.shape and out.dtype == x.dtype

    print("KERNEL_OK")
</pallas_src>

<mosaic_0001>
module attributes {stable_mosaic.version = 11 : i64} {
  func.func @_shuffle_kernel(%arg0: i32, %arg1: i32, %arg2: i32, %arg3: memref<8x32x64xf32, #tpu.memory_space<vmem>>, %arg4: memref<8x64x32xf32, #tpu.memory_space<vmem>>) attributes {dimension_semantics = [#tpu.dimension_semantics<parallel>, #tpu.dimension_semantics<parallel>, #tpu.dimension_semantics<parallel>], iteration_bounds = array<i64: 1, 1, 1>, scalar_prefetch = 0 : i64, scratch_operands = 0 : i64, tpu.core_type = #tpu.core_type<tc>, window_params = [{transform_indices = @transform_0, window_bounds = array<i64: 8, 32, 64>}, {transform_indices = @transform_1, window_bounds = array<i64: 8, 64, 32>}]} {
    %c0 = arith.constant 0 : index
    %c0_0 = arith.constant 0 : index
    %c0_1 = arith.constant 0 : index
    %0 = vector.load %arg3[%c0, %c0_0, %c0_1] : memref<8x32x64xf32, #tpu.memory_space<vmem>>, vector<8x32x64xf32>
    %1 = tpu.transpose %0, [0, 2, 1] : vector<8x32x64xf32> -> vector<8x64x32xf32>
    %c0_2 = arith.constant 0 : index
    %c0_3 = arith.constant 0 : index
    %c0_4 = arith.constant 0 : index
    %2 = vector.load %arg4[%c0_2, %c0_3, %c0_4] : memref<8x64x32xf32, #tpu.memory_space<vmem>>, vector<8x64x32xf32>
    tpu.vector_store %arg4[%c0_2, %c0_3, %c0_4], %1 {strides = array<i32>} : memref<8x64x32xf32, #tpu.memory_space<vmem>>, vector<8x64x32xf32>,
    return
  }
  func.func @transform_0(%arg0: i32, %arg1: i32, %arg2: i32) -> (i32, i32, i32) {
    %c0_i32 = arith.constant 0 : i32
    return %arg0, %arg1, %arg2 : i32, i32, i32
  }
  func.func @transform_1(%arg0: i32, %arg1: i32, %arg2: i32) -> (i32, i32, i32) {
    %c0_i32 = arith.constant 0 : i32
    return %arg0, %arg2, %arg1 : i32, i32, i32
  }
}

</mosaic_0001>

<llo_original>
// kernel: tpu_custom_call.1
$region0: #{tpu_custom_call.1}
  #allocation0 [shape = 'u32[]', space=smem, size = 0x4, offset = 0x4, fixed_abs, tag = 'smem constant byte address 0x4 - core index']
  #allocation1 [shape = 'u32[144,128]{1,0:T(1,128)}', space=vmem, size = 0x12000, scoped, tag = 'internal scratch']
  %s0 = inlined_call_operand.hbm [shape: f32[8,32,64], index: 0, kind: input, shape index: {}]
  %s1 = inlined_call_operand.vmem [shape: f32[8,64,32], index: 1, kind: output, shape index: {}]
  %s2 = sld [smem:[#allocation0]]
  $region18: #{tpu_custom_call.1} parent=0
    _
  %s4 = ssub.s32 1, %s2
  %s5 = scalar_select 0, %s4, %s2
  $region1: #{tpu_custom_call.1} parent=0
    #allocation2 [shape = 'u8[131072]{0}', space=vmem, size = 0x20000, scoped, tag = 'input window, operand 0, single buffered']
    #allocation3 [shape = 's32[1]{0}', space=sflag, size = 0x4, scoped, tag = 'scoped memory for tpu_custom_call.1']
    %6 = vsyncpa [#allocation3], 0
    // Predicated region
    $region2: #{tpu_custom_call.1} parent=1 // pred_check
      _
    $region3: #{tpu_custom_call.1} parent=1 // pred_check_branch
      %8 = sbr.rel (0) target = $region5
    $region4: #{tpu_custom_call.1} parent=1 // pred_region
      %s10 = ssub.s32 4096, 4096
      %11 = vsyncadd [#allocation3], %s10
      %s12 = sshll.u32 [#allocation2], 4
      %s13 = int_to_ptr.vmem [resolvable:$true] %s12
      %18 = dma.hbm_to_vmem [thread:$0]  %s0, 4096, %s13, [#allocation3], 128, 128, 8
    $region5: #{tpu_custom_call.1} parent=1 // pred_fallthru
      _
    // Predicated region
    $region6: #{tpu_custom_call.1} parent=1 // pred_check
      _
    $region7: #{tpu_custom_call.1} parent=1 // pred_check_branch
      %20 = sbr.rel (0) target = $region9
    $region8: #{tpu_custom_call.1} parent=1 // pred_region
      %21 = dma.done [#allocation3], 4096
    $region9: #{tpu_custom_call.1} parent=1 // pred_fallthru
      _
    %v22 = vld [vmem:[#allocation2] sm:$0xff]
    %v23 = vld [vmem:[#allocation2 + $0x8] sm:$0xff]
    %v24 = vld [vmem:[#allocation2 + $0x10] sm:$0xff]
    %v25 = vld [vmem:[#allocation2 + $0x18] sm:$0xff]
    %v26 = vld [vmem:[#allocation2 + $0x20] sm:$0xff]
    %v27 = vld [vmem:[#allocation2 + $0x28] sm:$0xff]
    %v28 = vld [vmem:[#allocation2 + $0x30] sm:$0xff]
    %v29 = vld [vmem:[#allocation2 + $0x38] sm:$0xff]
    %v30 = vld [vmem:[#allocation2 + $0x40] sm:$0xff]
    %v31 = vld [vmem:[#allocation2 + $0x48] sm:$0xff]
    %v32 = vld [vmem:[#allocation2 + $0x50] sm:$0xff]
    %v33 = vld [vmem:[#allocation2 + $0x58] sm:$0xff]
    %v34 = vld [vmem:[#allocation2 + $0x60] sm:$0xff]
    %v35 = vld [vmem:[#allocation2 + $0x68] sm:$0xff]
    %v36 = vld [vmem:[#allocation2 + $0x70] sm:$0xff]
    %v37 = vld [vmem:[#allocation2 + $0x78] sm:$0xff]
    %v38 = vld [vmem:[#allocation2 + $0x80] sm:$0xff]
    %v39 = vld [vmem:[#allocation2 + $0x88] sm:$0xff]
    %v40 = vld [vmem:[#allocation2 + $0x90] sm:$0xff]
    %v41 = vld [vmem:[#allocation2 + $0x98] sm:$0xff]
    %v42 = vld [vmem:[#allocation2 + $0xa0] sm:$0xff]
    %v43 = vld [vmem:[#allocation2 + $0xa8] sm:$0xff]
    %v44 = vld [vmem:[#allocation2 + $0xb0] sm:$0xff]
    %v45 = vld [vmem:[#allocation2 + $0xb8] sm:$0xff]
    %v46 = vld [vmem:[#allocation2 + $0xc0] sm:$0xff]
    %v47 = vld [vmem:[#allocation2 + $0xc8] sm:$0xff]
    %v48 = vld [vmem:[#allocation2 + $0xd0] sm:$0xff]
    %v49 = vld [vmem:[#allocation2 + $0xd8] sm:$0xff]
    %v50 = vld [vmem:[#allocation2 + $0xe0] sm:$0xff]
    %v51 = vld [vmem:[#allocation2 + $0xe8] sm:$0xff]
    %v52 = vld [vmem:[#allocation2 + $0xf0] sm:$0xff]
    %v53 = vld [vmem:[#allocation2 + $0xf8] sm:$0xff]
    %54 = vxpose.xlu0.b32.start [1/16] %v22, 128
    %55 = vxpose.xlu0.b32.cont [2/16] %v23, 128
    %56 = vxpose.xlu0.b32.cont [3/16] %v24, 128
    %57 = vxpose.xlu0.b32.cont [4/16] %v25, 128
    %58 = vxpose.xlu0.b32.cont [5/16] 0.0, 128
    %59 = vxpose.xlu0.b32.cont [6/16] 0.0, 128
    %60 = vxpose.xlu0.b32.cont [7/16] 0.0, 128
    %61 = vxpose.xlu0.b32.cont [8/16] 0.0, 128
    %62 = vxpose.xlu0.b32.cont [9/16] 0.0, 128
    %63 = vxpose.xlu0.b32.cont [10/16] 0.0, 128
    %64 = vxpose.xlu0.b32.cont [11/16] 0.0, 128
    %65 = vxpose.xlu0.b32.cont [12/16] 0.0, 128
    %66 = vxpose.xlu0.b32.cont [13/16] 0.0, 128
    %67 = vxpose.xlu0.b32.cont [14/16] 0.0, 128
    %68 = vxpose.xlu0.b32.cont [15/16] 0.0, 128
    %69 = vxpose.xlu0.b32.end [16/16] 0.0, 128
    %v70 = vpop.trf.xlu0
    %v71 = vpop.trf.xlu0
    %v72 = vpop.trf.xlu0
    %v73 = vpop.trf.xlu0
    %v74 = vpop.trf.xlu0
    %v75 = vpop.trf.xlu0
    %v76 = vpop.trf.xlu0
    %v77 = vpop.trf.xlu0
    %v78 = vpop.trf.xlu0
    %v79 = vpop.trf.xlu0
    %v80 = vpop.trf.xlu0
    %v81 = vpop.trf.xlu0
    %v82 = vpop.trf.xlu0
    %v83 = vpop.trf.xlu0
    %v84 = vpop.trf.xlu0
    %v85 = vpop.trf.xlu0
    %86 = vxpose.xlu0.b32.start [1/16] %v26, 128
    %87 = vxpose.xlu0.b32.cont [2/16] %v27, 128
    %88 = vxpose.xlu0.b32.cont [3/16] %v28, 128
    %89 = vxpose.xlu0.b32.cont [4/16] %v29, 128
    %90 = vxpose.xlu0.b32.cont [5/16] 0.0, 128
    %91 = vxpose.xlu0.b32.cont [6/16] 0.0, 128
    %92 = vxpose.xlu0.b32.cont [7/16] 0.0, 128
    %93 = vxpose.xlu0.b32.cont [8/16] 0.0, 128
    %94 = vxpose.xlu0.b32.cont [9/16] 0.0, 128
    %95 = vxpose.xlu0.b32.cont [10/16] 0.0, 128
    %96 = vxpose.xlu0.b32.cont [11/16] 0.0, 128
    %97 = vxpose.xlu0.b32.cont [12/16] 0.0, 128
    %98 = vxpose.xlu0.b32.cont [13/16] 0.0, 128
    %99 = vxpose.xlu0.b32.cont [14/16] 0.0, 128
    %100 = vxpose.xlu0.b32.cont [15/16] 0.0, 128
    %101 = vxpose.xlu0.b32.end [16/16] 0.0, 128
    %v102 = vpop.trf.xlu0
    %v103 = vpop.trf.xlu0
    %v104 = vpop.trf.xlu0
    %v105 = vpop.trf.xlu0
    %v106 = vpop.trf.xlu0
    %v107 = vpop.trf.xlu0
    %v108 = vpop.trf.xlu0
    %v109 = vpop.trf.xlu0
    %v110 = vpop.trf.xlu0
    %v111 = vpop.trf.xlu0
    %v112 = vpop.trf.xlu0
    %v113 = vpop.trf.xlu0
    %v114 = vpop.trf.xlu0
    %v115 = vpop.trf.xlu0
    %v116 = vpop.trf.xlu0
    %v117 = vpop.trf.xlu0
    %118 = vxpose.xlu0.b32.start [1/16] %v30, 128
    %119 = vxpose.xlu0.b32.cont [2/16] %v31, 128
    %120 = vxpose.xlu0.b32.cont [3/16] %v32, 128
    %121 = vxpose.xlu0.b32.cont [4/16] %v33, 128
    %122 = vxpose.xlu0.b32.cont [5/16] 0.0, 128
    %123 = vxpose.xlu0.b32.cont [6/16] 0.0, 128
    %124 = vxpose.xlu0.b32.cont [7/16] 0.0, 128
    %125 = vxpose.xlu0.b32.cont [8/16] 0.0, 128
    %126 = vxpose.xlu0.b32.cont [9/16] 0.0, 128
    %127 = vxpose.xlu0.b32.cont [10/16] 0.0, 128
    %128 = vxpose.xlu0.b32.cont [11/16] 0.0, 128
    %129 = vxpose.xlu0.b32.cont [12/16] 0.0, 128
    %130 = vxpose.xlu0.b32.cont [13/16] 0.0, 128
    %131 = vxpose.xlu0.b32.cont [14/16] 0.0, 128
    %132 = vxpose.xlu0.b32.cont [15/16] 0.0, 128
    %133 = vxpose.xlu0.b32.end [16/16] 0.0, 128
    %v134 = vpop.trf.xlu0
    %v135 = vpop.trf.xlu0
    %v136 = vpop.trf.xlu0
    %v137 = vpop.trf.xlu0
    %v138 = vpop.trf.xlu0
    %v139 = vpop.trf.xlu0
    %v140 = vpop.trf.xlu0
    %v141 = vpop.trf.xlu0
    %v142 = vpop.trf.xlu0
    %v143 = vpop.trf.xlu0
    %v144 = vpop.trf.xlu0
    %v145 = vpop.trf.xlu0
    %v146 = vpop.trf.xlu0
    %v147 = vpop.trf.xlu0
    %v148 = vpop.trf.xlu0
    %v149 = vpop.trf.xlu0
    %150 = vxpose.xlu0.b32.start [1/16] %v34, 128
    %151 = vxpose.xlu0.b32.cont [2/16] %v35, 128
    %152 = vxpose.xlu0.b32.cont [3/16] %v36, 128
    %153 = vxpose.xlu0.b32.cont [4/16] %v37, 128
    %154 = vxpose.xlu0.b32.cont [5/16] 0.0, 128
    %155 = vxpose.xlu0.b32.cont [6/16] 0.0, 128
    %156 = vxpose.xlu0.b32.cont [7/16] 0.0, 128
    %157 = vxpose.xlu0.b32.cont [8/16] 0.0, 128
    %158 = vxpose.xlu0.b32.cont [9/16] 0.0, 128
    %159 = vxpose.xlu0.b32.cont [10/16] 0.0, 128
    %160 = vxpose.xlu0.b32.cont [11/16] 0.0, 128
    %161 = vxpose.xlu0.b32.cont [12/16] 0.0, 128
    %162 = vxpose.xlu0.b32.cont [13/16] 0.0, 128
    %163 = vxpose.xlu0.b32.cont [14/16] 0.0, 128
    %164 = vxpose.xlu0.b32.cont [15/16] 0.0, 128
    %165 = vxpose.xlu0.b32.end [16/16] 0.0, 128
    %v166 = vpop.trf.xlu0
    %v167 = vpop.trf.xlu0
    %v168 = vpop.trf.xlu0
    %v169 = vpop.trf.xlu0
    %v170 = vpop.trf.xlu0
    %v171 = vpop.trf.xlu0
    %v172 = vpop.trf.xlu0
    %v173 = vpop.trf.xlu0
    %v174 = vpop.trf.xlu0
    %v175 = vpop.trf.xlu0
    %v176 = vpop.trf.xlu0
    %v177 = vpop.trf.xlu0
    %v178 = vpop.trf.xlu0
    %v179 = vpop.trf.xlu0
    %v180 = vpop.trf.xlu0
    %v181 = vpop.trf.xlu0
    %182 = vxpose.xlu0.b32.start [1/16] %v38, 128
    %183 = vxpose.xlu0.b32.cont [2/16] %v39, 128
    %184 = vxpose.xlu0.b32.cont [3/16] %v40, 128
    %185 = vxpose.xlu0.b32.cont [4/16] %v41, 128
    %186 = vxpose.xlu0.b32.cont [5/16] 0.0, 128
    %187 = vxpose.xlu0.b32.cont [6/16] 0.0, 128
    %188 = vxpose.xlu0.b32.cont [7/16] 0.0, 128
    %189 = vxpose.xlu0.b32.cont [8/16] 0.0, 128
    %190 = vxpose.xlu0.b32.cont [9/16] 0.0, 128
    %191 = vxpose.xlu0.b32.cont [10/16] 0.0, 128
    %192 = vxpose.xlu0.b32.cont [11/16] 0.0, 128
    %193 = vxpose.xlu0.b32.cont [12/16] 0.0, 128
    %194 = vxpose.xlu0.b32.cont [13/16] 0.0, 128
    %195 = vxpose.xlu0.b32.cont [14/16] 0.0, 128
    %196 = vxpose.xlu0.b32.cont [15/16] 0.0, 128
    %197 = vxpose.xlu0.b32.end [16/16] 0.0, 128
    %v198 = vpop.trf.xlu0
    %v199 = vpop.trf.xlu0
    %v200 = vpop.trf.xlu0
    %v201 = vpop.trf.xlu0
    %v202 = vpop.trf.xlu0
    %v203 = vpop.trf.xlu0
    %v204 = vpop.trf.xlu0
    %v205 = vpop.trf.xlu0
    %v206 = vpop.trf.xlu0
    %v207 = vpop.trf.xlu0
    %v208 = vpop.trf.xlu0
    %v209 = vpop.trf.xlu0
    %v210 = vpop.trf.xlu0
    %v211 = vpop.trf.xlu0
    %v212 = vpop.trf.xlu0
    %v213 = vpop.trf.xlu0
    %214 = vxpose.xlu0.b32.start [1/16] %v42, 128
    %215 = vxpose.xlu0.b32.cont [2/16] %v43, 128
    %216 = vxpose.xlu0.b32.cont [3/16] %v44, 128
    %217 = vxpose.xlu0.b32.cont [4/16] %v45, 128
    %218 = vxpose.xlu0.b32.cont [5/16] 0.0, 128
    %219 = vxpose.xlu0.b32.cont [6/16] 0.0, 128
    %220 = vxpose.xlu0.b32.cont [7/16] 0.0, 128
    %221 = vxpose.xlu0.b32.cont [8/16] 0.0, 128
    %222 = vxpose.xlu0.b32.cont [9/16] 0.0, 128
    %223 = vxpose.xlu0.b32.cont [10/16] 0.0, 128
    %224 = vxpose.xlu0.b32.cont [11/16] 0.0, 128
    %225 = vxpose.xlu0.b32.cont [12/16] 0.0, 128
    %226 = vxpose.xlu0.b32.cont [13/16] 0.0, 128
    %227 = vxpose.xlu0.b32.cont [14/16] 0.0, 128
    %228 = vxpose.xlu0.b32.cont [15/16] 0.0, 128
    %229 = vxpose.xlu0.b32.end [16/16] 0.0, 128
    %v230 = vpop.trf.xlu0
    %v231 = vpop.trf.xlu0
    %v232 = vpop.trf.xlu0
    %v233 = vpop.trf.xlu0
    %v234 = vpop.trf.xlu0
    %v235 = vpop.trf.xlu0
    %v236 = vpop.trf.xlu0
    %v237 = vpop.trf.xlu0
    %v238 = vpop.trf.xlu0
    %v239 = vpop.trf.xlu0
    %v240 = vpop.trf.xlu0
    %v241 = vpop.trf.xlu0
    %v242 = vpop.trf.xlu0
    %v243 = vpop.trf.xlu0
    %v244 = vpop.trf.xlu0
    %v245 = vpop.trf.xlu0
    %246 = vxpose.xlu0.b32.start [1/16] %v46, 128
    %247 = vxpose.xlu0.b32.cont [2/16] %v47, 128
    %248 = vxpose.xlu0.b32.cont [3/16] %v48, 128
    %249 = vxpose.xlu0.b32.cont [4/16] %v49, 128
    %250 = vxpose.xlu0.b32.cont [5/16] 0.0, 128
    %251 = vxpose.xlu0.b32.cont [6/16] 0.0, 128
    %252 = vxpose.xlu0.b32.cont [7/16] 0.0, 128
    %253 = vxpose.xlu0.b32.cont [8/16] 0.0, 128
    %254 = vxpose.xlu0.b32.cont [9/16] 0.0, 128
    %255 = vxpose.xlu0.b32.cont [10/16] 0.0, 128
    %256 = vxpose.xlu0.b32.cont [11/16] 0.0, 128
    %257 = vxpose.xlu0.b32.cont [12/16] 0.0, 128
    %258 = vxpose.xlu0.b32.cont [13/16] 0.0, 128
    %259 = vxpose.xlu0.b32.cont [14/16] 0.0, 128
    %260 = vxpose.xlu0.b32.cont [15/16] 0.0, 128
    %261 = vxpose.xlu0.b32.end [16/16] 0.0, 128
    %v262 = vpop.trf.xlu0
    %v263 = vpop.trf.xlu0
    %v264 = vpop.trf.xlu0
    %v265 = vpop.trf.xlu0
    %v266 = vpop.trf.xlu0
    %v267 = vpop.trf.xlu0
    %v268 = vpop.trf.xlu0
    %v269 = vpop.trf.xlu0
    %v270 = vpop.trf.xlu0
    %v271 = vpop.trf.xlu0
    %v272 = vpop.trf.xlu0
    %v273 = vpop.trf.xlu0
    %v274 = vpop.trf.xlu0
    %v275 = vpop.trf.xlu0
    %v276 = vpop.trf.xlu0
    %v277 = vpop.trf.xlu0
    %278 = vxpose.xlu0.b32.start [1/16] %v50, 128
    %279 = vxpose.xlu0.b32.cont [2/16] %v51, 128
    %280 = vxpose.xlu0.b32.cont [3/16] %v52, 128
    %281 = vxpose.xlu0.b32.cont [4/16] %v53, 128
    %282 = vxpose.xlu0.b32.cont [5/16] 0.0, 128
    %283 = vxpose.xlu0.b32.cont [6/16] 0.0, 128
    %284 = vxpose.xlu0.b32.cont [7/16] 0.0, 128
    %285 = vxpose.xlu0.b32.cont [8/16] 0.0, 128
    %286 = vxpose.xlu0.b32.cont [9/16] 0.0, 128
    %287 = vxpose.xlu0.b32.cont [10/16] 0.0, 128
    %288 = vxpose.xlu0.b32.cont [11/16] 0.0, 128
    %289 = vxpose.xlu0.b32.cont [12/16] 0.0, 128
    %290 = vxpose.xlu0.b32.cont [13/16] 0.0, 128
    %291 = vxpose.xlu0.b32.cont [14/16] 0.0, 128
    %292 = vxpose.xlu0.b32.cont [15/16] 0.0, 128
    %293 = vxpose.xlu0.b32.end [16/16] 0.0, 128
    %v294 = vpop.trf.xlu0
    %v295 = vpop.trf.xlu0
    %v296 = vpop.trf.xlu0
    %v297 = vpop.trf.xlu0
    %v298 = vpop.trf.xlu0
    %v299 = vpop.trf.xlu0
    %v300 = vpop.trf.xlu0
    %v301 = vpop.trf.xlu0
    %v302 = vpop.trf.xlu0
    %v303 = vpop.trf.xlu0
    %v304 = vpop.trf.xlu0
    %v305 = vpop.trf.xlu0
    %v306 = vpop.trf.xlu0
    %v307 = vpop.trf.xlu0
    %v308 = vpop.trf.xlu0
    %v309 = vpop.trf.xlu0
    %vm310 = vcmask 261120
    %311 = vst.msk [vmem:[%s1] sm:$0xff] %vm310, %v70
    %312 = vst.msk [vmem:[%s1 + $0x8] sm:$0xff] %vm310, %v71
    %313 = vst.msk [vmem:[%s1 + $0x10] sm:$0xff] %vm310, %v72
    %314 = vst.msk [vmem:[%s1 + $0x18] sm:$0xff] %vm310, %v73
    %315 = vst.msk [vmem:[%s1 + $0x20] sm:$0xff] %vm310, %v74
    %316 = vst.msk [vmem:[%s1 + $0x28] sm:$0xff] %vm310, %v75
    %317 = vst.msk [vmem:[%s1 + $0x30] sm:$0xff] %vm310, %v76
    %318 = vst.msk [vmem:[%s1 + $0x38] sm:$0xff] %vm310, %v77
    %319 = vst.msk [vmem:[%s1 + $0x40] sm:$0xff] %vm310, %v102
    %320 = vst.msk [vmem:[%s1 + $0x48] sm:$0xff] %vm310, %v103
    %321 = vst.msk [vmem:[%s1 + $0x50] sm:$0xff] %vm310, %v104
    %322 = vst.msk [vmem:[%s1 + $0x58] sm:$0xff] %vm310, %v105
    %323 = vst.msk [vmem:[%s1 + $0x60] sm:$0xff] %vm310, %v106
    %324 = vst.msk [vmem:[%s1 + $0x68] sm:$0xff] %vm310, %v107
    %325 = vst.msk [vmem:[%s1 + $0x70] sm:$0xff] %vm310, %v108
    %326 = vst.msk [vmem:[%s1 + $0x78] sm:$0xff] %vm310, %v109
    %327 = vst.msk [vmem:[%s1 + $0x80] sm:$0xff] %vm310, %v134
    %328 = vst.msk [vmem:[%s1 + $0x88] sm:$0xff] %vm310, %v135
    %329 = vst.msk [vmem:[%s1 + $0x90] sm:$0xff] %vm310, %v136
    %330 = vst.msk [vmem:[%s1 + $0x98] sm:$0xff] %vm310, %v137
    %331 = vst.msk [vmem:[%s1 + $0xa0] sm:$0xff] %vm310, %v138
    %332 = vst.msk [vmem:[%s1 + $0xa8] sm:$0xff] %vm310, %v139
    %333 = vst.msk [vmem:[%s1 + $0xb0] sm:$0xff] %vm310, %v140
    %334 = vst.msk [vmem:[%s1 + $0xb8] sm:$0xff] %vm310, %v141
    %335 = vst.msk [vmem:[%s1 + $0xc0] sm:$0xff] %vm310, %v166
    %336 = vst.msk [vmem:[%s1 + $0xc8] sm:$0xff] %vm310, %v167
    %337 = vst.msk [vmem:[%s1 + $0xd0] sm:$0xff] %vm310, %v168
    %338 = vst.msk [vmem:[%s1 + $0xd8] sm:$0xff] %vm310, %v169
    %339 = vst.msk [vmem:[%s1 + $0xe0] sm:$0xff] %vm310, %v170
    %340 = vst.msk [vmem:[%s1 + $0xe8] sm:$0xff] %vm310, %v171
    %341 = vst.msk [vmem:[%s1 + $0xf0] sm:$0xff] %vm310, %v172
    %342 = vst.msk [vmem:[%s1 + $0xf8] sm:$0xff] %vm310, %v173
    %343 = vst.msk [vmem:[%s1 + $0x100] sm:$0xff] %vm310, %v198
    %344 = vst.msk [vmem:[%s1 + $0x108] sm:$0xff] %vm310, %v199
    %345 = vst.msk [vmem:[%s1 + $0x110] sm:$0xff] %vm310, %v200
    %346 = vst.msk [vmem:[%s1 + $0x118] sm:$0xff] %vm310, %v201
    %347 = vst.msk [vmem:[%s1 + $0x120] sm:$0xff] %vm310, %v202
    %348 = vst.msk [vmem:[%s1 + $0x128] sm:$0xff] %vm310, %v203
    %349 = vst.msk [vmem:[%s1 + $0x130] sm:$0xff] %vm310, %v204
    %350 = vst.msk [vmem:[%s1 + $0x138] sm:$0xff] %vm310, %v205
    %351 = vst.msk [vmem:[%s1 + $0x140] sm:$0xff] %vm310, %v230
    %352 = vst.msk [vmem:[%s1 + $0x148] sm:$0xff] %vm310, %v231
    %353 = vst.msk [vmem:[%s1 + $0x150] sm:$0xff] %vm310, %v232
    %354 = vst.msk [vmem:[%s1 + $0x158] sm:$0xff] %vm310, %v233
    %355 = vst.msk [vmem:[%s1 + $0x160] sm:$0xff] %vm310, %v234
    %356 = vst.msk [vmem:[%s1 + $0x168] sm:$0xff] %vm310, %v235
    %357 = vst.msk [vmem:[%s1 + $0x170] sm:$0xff] %vm310, %v236
    %358 = vst.msk [vmem:[%s1 + $0x178] sm:$0xff] %vm310, %v237
    %359 = vst.msk [vmem:[%s1 + $0x180] sm:$0xff] %vm310, %v262
    %360 = vst.msk [vmem:[%s1 + $0x188] sm:$0xff] %vm310, %v263
    %361 = vst.msk [vmem:[%s1 + $0x190] sm:$0xff] %vm310, %v264
    %362 = vst.msk [vmem:[%s1 + $0x198] sm:$0xff] %vm310, %v265
    %363 = vst.msk [vmem:[%s1 + $0x1a0] sm:$0xff] %vm310, %v266
    %364 = vst.msk [vmem:[%s1 + $0x1a8] sm:$0xff] %vm310, %v267
    %365 = vst.msk [vmem:[%s1 + $0x1b0] sm:$0xff] %vm310, %v268
    %366 = vst.msk [vmem:[%s1 + $0x1b8] sm:$0xff] %vm310, %v269
    %367 = vst.msk [vmem:[%s1 + $0x1c0] sm:$0xff] %vm310, %v294
    %368 = vst.msk [vmem:[%s1 + $0x1c8] sm:$0xff] %vm310, %v295
    %369 = vst.msk [vmem:[%s1 + $0x1d0] sm:$0xff] %vm310, %v296
    %370 = vst.msk [vmem:[%s1 + $0x1d8] sm:$0xff] %vm310, %v297
    %371 = vst.msk [vmem:[%s1 + $0x1e0] sm:$0xff] %vm310, %v298
    %372 = vst.msk [vmem:[%s1 + $0x1e8] sm:$0xff] %vm310, %v299
    %373 = vst.msk [vmem:[%s1 + $0x1f0] sm:$0xff] %vm310, %v300
    %374 = vst.msk [vmem:[%s1 + $0x1f8] sm:$0xff] %vm310, %v301
    // Predicated region
    $region10: #{tpu_custom_call.1} parent=1 // pred_check
      _
    $region11: #{tpu_custom_call.1} parent=1 // pred_check_branch
      %376 = sbr.rel (0) target = $region13
    $region12: #{tpu_custom_call.1} parent=1 // pred_region
      _
    $region13: #{tpu_custom_call.1} parent=1 // pred_fallthru
      _
    // Predicated region
    $region14: #{tpu_custom_call.1} parent=1 // pred_check
      _
    $region15: #{tpu_custom_call.1} parent=1 // pred_check_branch
      %378 = sbr.rel (0) target = $region17
    $region16: #{tpu_custom_call.1} parent=1 // pred_region
      _
    $region17: #{tpu_custom_call.1} parent=1 // pred_fallthru
      _
    %379 = vsyncpa [#allocation3], 1

</llo_original>
